<compile_context>
chip_gen: v6e
topology: v6e:2x2x1
jax: 0.10.0
libtpu: 0.0.40
codegen_flags: <defaults>
</compile_context>

<pallas_src>
import jax
import jax.numpy as jnp
from jax.experimental import pallas as pl
from jax.experimental.pallas import tpu as pltpu

B = 2          # batch
C = 4          # channels
H = 16         # height
W = 16         # width
D = C * H * W  # flattened input features = 1024
HID = 128      # hidden width of the embedding MLP
E = 32         # embedding dimension


def _mlp_embed(x_f32, w1_ref, b1_ref, w2_ref, b2_ref):
    """Shared embedding-net math: Linear(bf16 MXU, f32 acc) -> ReLU -> Linear."""
    h = jnp.dot(x_f32.astype(jnp.bfloat16), w1_ref[...],
                preferred_element_type=jnp.float32) + b1_ref[...]
    h = jnp.maximum(h, 0.0)
    return jnp.dot(h, w2_ref[...], preferred_element_type=jnp.float32) + b2_ref[...]


def siamese_kernel(x1_ref, x2_ref, w1_ref, b1_ref, w2_ref, b2_ref,
                   o1_ref, o2_ref, xs_ref):
    """Single kernel step: stack both branches into one batch, embed once."""
    # Stack the two branches into a (2*B, D) VMEM scratch (masked sublane
    # stores; 16 KiB, trivial) so one matmul pair covers both branches and
    # the shared weights are read exactly once.
    xs_ref[0:B, :] = x1_ref[...]
    xs_ref[B:2 * B, :] = x2_ref[...]

    out = _mlp_embed(xs_ref[...], w1_ref, b1_ref, w2_ref, b2_ref)  # (2B, E) f32

    # Split back into the two siamese outputs in-kernel (static sublane slices).
    o1_ref[...] = out[0:B, :]
    o2_ref[...] = out[B:2 * B, :]


def embed_kernel(x_ref, w1_ref, b1_ref, w2_ref, b2_ref, o_ref):
    """Single-branch embedding (SiameseNet.get_embedding) — no wasted work."""
    o_ref[...] = _mlp_embed(x_ref[...], w1_ref, b1_ref, w2_ref, b2_ref)


_VMEM_SPEC = pl.BlockSpec(memory_space=pltpu.MemorySpace.VMEM)


def siamese_forward(x1, x2, params):
    """SiameseNet.forward: (embedding(x1), embedding(x2)) with shared weights."""
    w1, b1, w2, b2 = params
    x1f = x1.reshape(B, D)   # contiguous reshape — no HBM copy
    x2f = x2.reshape(B, D)

    out1, out2 = pl.pallas_call(
        siamese_kernel,
        out_shape=(jax.ShapeDtypeStruct((B, E), jnp.float32),
                   jax.ShapeDtypeStruct((B, E), jnp.float32)),
        in_specs=[_VMEM_SPEC] * 6,
        out_specs=(_VMEM_SPEC, _VMEM_SPEC),
        scratch_shapes=[pltpu.VMEM((2 * B, D), jnp.float32)],
    )(x1f, x2f, w1, b1, w2, b2)
    return out1, out2


def get_embedding(x, params):
    """SiameseNet.get_embedding: single-branch embedding (dedicated call)."""
    w1, b1, w2, b2 = params
    xf = x.reshape(B, D)
    return pl.pallas_call(
        embed_kernel,
        out_shape=jax.ShapeDtypeStruct((B, E), jnp.float32),
        in_specs=[_VMEM_SPEC] * 5,
        out_specs=_VMEM_SPEC,
    )(xf, w1, b1, w2, b2)


def init_params(key):
    """Deterministic synthetic weights for the embedding MLP (W1 stored bf16)."""
    k1, k2 = jax.random.split(key)
    w1 = (jax.random.normal(k1, (D, HID), jnp.float32)
          * (1.0 / jnp.sqrt(D))).astype(jnp.bfloat16)   # dominant HBM traffic -> bf16
    b1 = jnp.zeros((1, HID), jnp.float32)
    w2 = jax.random.normal(k2, (HID, E), jnp.float32) * (1.0 / jnp.sqrt(HID))
    b2 = jnp.zeros((1, E), jnp.float32)
    return w1, b1, w2, b2


if __name__ == "__main__":
    key = jax.random.PRNGKey(0)
    kx1, kx2, kp = jax.random.split(key, 3)

    x1 = jax.random.normal(kx1, (B, C, H, W), jnp.float32)  # NCHW like PyTorch
    x2 = jax.random.normal(kx2, (B, C, H, W), jnp.float32)
    params = init_params(kp)

    out1, out2 = jax.jit(siamese_forward)(x1, x2, params)
    emb = jax.jit(get_embedding)(x1, params)
    jax.block_until_ready((out1, out2, emb))

    # reference in plain JAX using the same bf16-weight / f32-accum math
    def ref_embed(x, p):
        w1, b1, w2, b2 = p
        xb = x.reshape(B, D).astype(jnp.bfloat16)
        h = jnp.maximum(
            jnp.dot(xb, w1, preferred_element_type=jnp.float32) + b1, 0.0)
        return jnp.dot(h, w2, preferred_element_type=jnp.float32) + b2

    r1, r2 = ref_embed(x1, params), ref_embed(x2, params)
    assert out1.shape == (B, E) and out2.shape == (B, E)
    assert jnp.allclose(out1, r1, atol=2e-3, rtol=2e-3)
    assert jnp.allclose(out2, r2, atol=2e-3, rtol=2e-3)
    assert jnp.allclose(emb, r1, atol=2e-3, rtol=2e-3)

    print("KERNEL_OK")
</pallas_src>

<mosaic_0001>
module attributes {stable_mosaic.version = 11 : i64} {
  func.func @siamese_kernel(%arg0: memref<2x1024xf32, #tpu.memory_space<vmem>>, %arg1: memref<2x1024xf32, #tpu.memory_space<vmem>>, %arg2: memref<1024x128xbf16, #tpu.memory_space<vmem>>, %arg3: memref<1x128xf32, #tpu.memory_space<vmem>>, %arg4: memref<128x32xf32, #tpu.memory_space<vmem>>, %arg5: memref<1x32xf32, #tpu.memory_space<vmem>>, %arg6: memref<2x32xf32, #tpu.memory_space<vmem>>, %arg7: memref<2x32xf32, #tpu.memory_space<vmem>>, %arg8: memref<4x1024xf32, #tpu.memory_space<vmem>>) attributes {dimension_semantics = [], scalar_prefetch = 0 : i64, scratch_operands = 1 : i64, tpu.core_type = #tpu.core_type<tc>} {
    %c0 = arith.constant 0 : index
    %c0_0 = arith.constant 0 : index
    %0 = vector.load %arg0[%c0, %c0_0] : memref<2x1024xf32, #tpu.memory_space<vmem>>, vector<2x1024xf32>
    %c0_1 = arith.constant 0 : index
    %c0_2 = arith.constant 0 : index
    %1 = vector.load %arg8[%c0_1, %c0_2] : memref<4x1024xf32, #tpu.memory_space<vmem>>, vector<2x1024xf32>
    tpu.vector_store %arg8[%c0_1, %c0_2], %0 {strides = array<i32>} : memref<4x1024xf32, #tpu.memory_space<vmem>>, vector<2x1024xf32>,
    %c0_3 = arith.constant 0 : index
    %c0_4 = arith.constant 0 : index
    %2 = vector.load %arg1[%c0_3, %c0_4] : memref<2x1024xf32, #tpu.memory_space<vmem>>, vector<2x1024xf32>
    %c2 = arith.constant 2 : index
    %c0_5 = arith.constant 0 : index
    %3 = vector.load %arg8[%c2, %c0_5] : memref<4x1024xf32, #tpu.memory_space<vmem>>, vector<2x1024xf32>
    tpu.vector_store %arg8[%c2, %c0_5], %2 {strides = array<i32>} : memref<4x1024xf32, #tpu.memory_space<vmem>>, vector<2x1024xf32>,
    %c0_6 = arith.constant 0 : index
    %c0_7 = arith.constant 0 : index
    %4 = vector.load %arg8[%c0_6, %c0_7] : memref<4x1024xf32, #tpu.memory_space<vmem>>, vector<4x1024xf32>
    %5 = arith.truncf %4 : vector<4x1024xf32> to vector<4x1024xbf16>
    %c0_8 = arith.constant 0 : index
    %c0_9 = arith.constant 0 : index
    %6 = vector.load %arg2[%c0_8, %c0_9] : memref<1024x128xbf16, #tpu.memory_space<vmem>>, vector<1024x128xbf16>
    %cst = arith.constant dense<0.000000e+00> : vector<4x128xf32>
    %7 = tpu.matmul %5, %6, %cst {dimension_numbers = #tpu.dot_dimension_numbers<[1], [0], [0], [1], [0, 0, 1, 1], [], []>} : vector<4x1024xbf16>, vector<1024x128xbf16>, vector<4x128xf32> -> vector<4x128xf32>
    %c0_10 = arith.constant 0 : index
    %c0_11 = arith.constant 0 : index
    %8 = vector.load %arg3[%c0_10, %c0_11] : memref<1x128xf32, #tpu.memory_space<vmem>>, vector<1x128xf32>
    %9 = vector.broadcast %8 : vector<1x128xf32> to vector<4x128xf32>
    %10 = arith.addf %7, %9 : vector<4x128xf32>
    %cst_12 = arith.constant 0.000000e+00 : f32
    %11 = vector.broadcast %cst_12 : f32 to vector<4x128xf32>
    %12 = arith.maximumf %10, %11 : vector<4x128xf32>
    %c0_13 = arith.constant 0 : index
    %c0_14 = arith.constant 0 : index
    %13 = vector.load %arg4[%c0_13, %c0_14] : memref<128x32xf32, #tpu.memory_space<vmem>>, vector<128x32xf32>
    %cst_15 = arith.constant dense<0.000000e+00> : vector<4x32xf32>
    %14 = tpu.matmul %12, %13, %cst_15 {dimension_numbers = #tpu.dot_dimension_numbers<[1], [0], [0], [1], [0, 0, 1, 1], [], []>} : vector<4x128xf32>, vector<128x32xf32>, vector<4x32xf32> -> vector<4x32xf32>
    %c0_16 = arith.constant 0 : index
    %c0_17 = arith.constant 0 : index
    %15 = vector.load %arg5[%c0_16, %c0_17] : memref<1x32xf32, #tpu.memory_space<vmem>>, vector<1x32xf32>
    %16 = vector.broadcast %15 : vector<1x32xf32> to vector<4x32xf32>
    %17 = arith.addf %14, %16 : vector<4x32xf32>
    %18 = vector.extract_strided_slice %17 {offsets = [0, 0], sizes = [2, 32], strides = [1, 1]} : vector<4x32xf32> to vector<2x32xf32>
    %c0_18 = arith.constant 0 : index
    %c0_19 = arith.constant 0 : index
    %19 = vector.load %arg6[%c0_18, %c0_19] : memref<2x32xf32, #tpu.memory_space<vmem>>, vector<2x32xf32>
    tpu.vector_store %arg6[%c0_18, %c0_19], %18 {strides = array<i32>} : memref<2x32xf32, #tpu.memory_space<vmem>>, vector<2x32xf32>,
    %20 = vector.extract_strided_slice %17 {offsets = [2, 0], sizes = [2, 32], strides = [1, 1]} : vector<4x32xf32> to vector<2x32xf32>
    %c0_20 = arith.constant 0 : index
    %c0_21 = arith.constant 0 : index
    %21 = vector.load %arg7[%c0_20, %c0_21] : memref<2x32xf32, #tpu.memory_space<vmem>>, vector<2x32xf32>
    tpu.vector_store %arg7[%c0_20, %c0_21], %20 {strides = array<i32>} : memref<2x32xf32, #tpu.memory_space<vmem>>, vector<2x32xf32>,
    return
  }
}

</mosaic_0001>

<llo_original>
// kernel: siamese_forward.1
$region0: #{siamese_forward.1}
  #allocation0 [shape = 'u32[]', space=smem, size = 0x4, offset = 0x4, fixed_abs, tag = 'smem constant byte address 0x4 - core index']
  #allocation1 [shape = 'u32[144,128]{1,0:T(1,128)}', space=vmem, size = 0x12000, scoped, tag = 'internal scratch']
  #allocation2 [shape = 'f32[4,1024]{1,0:T(4,128)}', space=vmem, size = 0x4000, scoped, tag = 'scratch operand']
  %s0 = inlined_call_operand.vmem [shape: f32[2,1024], index: 0, kind: input, shape index: {}]
  %s1 = inlined_call_operand.vmem [shape: f32[2,1024], index: 1, kind: input, shape index: {}]
  %s2 = inlined_call_operand.hbm [shape: bf16[1024,128], index: 2, kind: input, shape index: {}]
  %s3 = inlined_call_operand.vmem [shape: f32[1,128], index: 3, kind: input, shape index: {}]
  %s4 = inlined_call_operand.vmem [shape: f32[128,32], index: 4, kind: input, shape index: {}]
  %s5 = inlined_call_operand.vmem [shape: f32[1,32], index: 5, kind: input, shape index: {}]
  %s6 = inlined_call_operand.hbm [shape: f32[2,32], index: 6, kind: output, shape index: {0}]
  %s7 = inlined_call_operand.hbm [shape: f32[2,32], index: 7, kind: output, shape index: {1}]
  %8 = xla_tuple %s6, %s7
  %s9 = sld [smem:[#allocation0]]
  $region46: #{siamese_forward.1} parent=0
    _
  %s11 = ssub.s32 1, %s9
  %s12 = scalar_select 0, %s11, %s9
  $region1: #{siamese_forward.1} parent=0
    #allocation3 [shape = 'u8[262144]{0}', space=vmem, size = 0x40000, scoped, tag = 'input window, operand 2, single buffered']
    #allocation4 [shape = 's32[1]{0}', space=sflag, size = 0x4, scoped, tag = 'scoped memory for siamese_forward.1']
    #allocation5 [shape = 's32[1]{0}', space=sflag, size = 0x4, scoped, tag = 'scoped memory for siamese_forward.1']
    #allocation6 [shape = 'u8[1024]{0}', space=vmem, size = 0x400, scoped, tag = 'output window, operand 0, single buffered']
    #allocation7 [shape = 'u8[1024]{0}', space=vmem, size = 0x400, scoped, tag = 'output window, operand 1, single buffered']
    #allocation8 [shape = 's32[1]{0}', space=sflag, size = 0x4, scoped, tag = 'scoped memory for siamese_forward.1']
    %13 = vsyncpa [#allocation4], 0
    %14 = vsyncpa [#allocation5], 0
    %15 = vsyncpa [#allocation8], 0
    // Predicated region
    $region2: #{siamese_forward.1} parent=1 // pred_check
      _
    $region3: #{siamese_forward.1} parent=1 // pred_check_branch
      %17 = sbr.rel (0) target = $region5
    $region4: #{siamese_forward.1} parent=1 // pred_region
      _
    $region5: #{siamese_forward.1} parent=1 // pred_fallthru
      _
    // Predicated region
    $region6: #{siamese_forward.1} parent=1 // pred_check
      _
    $region7: #{siamese_forward.1} parent=1 // pred_check_branch
      %19 = sbr.rel (0) target = $region9
    $region8: #{siamese_forward.1} parent=1 // pred_region
      _
    $region9: #{siamese_forward.1} parent=1 // pred_fallthru
      _
    // Predicated region
    $region10: #{siamese_forward.1} parent=1 // pred_check
      _
    $region11: #{siamese_forward.1} parent=1 // pred_check_branch
      %21 = sbr.rel (0) target = $region13
    $region12: #{siamese_forward.1} parent=1 // pred_region
      %s23 = ssub.s32 8192, 8192
      %24 = vsyncadd [#allocation4], %s23
      %s25 = sshll.u32 [#allocation3], 4
      %s26 = int_to_ptr.vmem [resolvable:$true] %s25
      %31 = dma.hbm_to_vmem [thread:$0]  %s2, 8192, %s26, [#allocation4], 64, 64, 4
    $region13: #{siamese_forward.1} parent=1 // pred_fallthru
      _
    // Predicated region
    $region14: #{siamese_forward.1} parent=1 // pred_check
      _
    $region15: #{siamese_forward.1} parent=1 // pred_check_branch
      %33 = sbr.rel (0) target = $region17
    $region16: #{siamese_forward.1} parent=1 // pred_region
      _
    $region17: #{siamese_forward.1} parent=1 // pred_fallthru
      _
    // Predicated region
    $region18: #{siamese_forward.1} parent=1 // pred_check
      _
    $region19: #{siamese_forward.1} parent=1 // pred_check_branch
      %35 = sbr.rel (0) target = $region21
    $region20: #{siamese_forward.1} parent=1 // pred_region
      _
    $region21: #{siamese_forward.1} parent=1 // pred_fallthru
      _
    // Predicated region
    $region22: #{siamese_forward.1} parent=1 // pred_check
      _
    $region23: #{siamese_forward.1} parent=1 // pred_check_branch
      %37 = sbr.rel (0) target = $region25
    $region24: #{siamese_forward.1} parent=1 // pred_region
      _
    $region25: #{siamese_forward.1} parent=1 // pred_fallthru
      _
    // Predicated region
    $region26: #{siamese_forward.1} parent=1 // pred_check
      _
    $region27: #{siamese_forward.1} parent=1 // pred_check_branch
      %39 = sbr.rel (0) target = $region29
    $region28: #{siamese_forward.1} parent=1 // pred_region
      %40 = dma.done [#allocation4], 8192
    $region29: #{siamese_forward.1} parent=1 // pred_fallthru
      _
    %v42 = vld [vmem:[%s0] sm:$0xff]
    %v43 = vld [vmem:[%s0 + $0x8] sm:$0xff]
    %v46 = vcombine.high %v42, %v42
    %v48 = vunpack.c.l.s4 1983009808
    %v49 = vunpack.c.0.s8 %v48
    %v50 = vlaneseq
    %v51 = vshrl.u32 %v50, 7
    %v52 = vsub.s32 %v49, %v51
    %v53 = vrot.slane %v42, %v52
    %v55 = vunpack.c.l.s4 1983009808
    %v56 = vunpack.c.0.s8 %v55
    %v57 = vlaneseq
    %v58 = vshrl.u32 %v57, 7
    %v59 = vsub.s32 %v56, %v58
    %v60 = vrot.slane %v46, %v59
    %v61 = vcombine.high %v43, %v43
    %v63 = vunpack.c.l.s4 1983009808
    %v64 = vunpack.c.0.s8 %v63
    %v65 = vlaneseq
    %v66 = vshrl.u32 %v65, 7
    %v67 = vsub.s32 %v64, %v66
    %v68 = vrot.slane %v43, %v67
    %v70 = vunpack.c.l.s4 1983009808
    %v71 = vunpack.c.0.s8 %v70
    %v72 = vlaneseq
    %v73 = vshrl.u32 %v72, 7
    %v74 = vsub.s32 %v71, %v73
    %v75 = vrot.slane %v61, %v74
    %80 = vst [vmem:[#allocation2] sm:$0x33] %v53
    %81 = vst [vmem:[#allocation2 + $0x8] sm:$0x33] %v60
    %82 = vst [vmem:[#allocation2 + $0x10] sm:$0x33] %v68
    %83 = vst [vmem:[#allocation2 + $0x18] sm:$0x33] %v75
    %v84 = vld [vmem:[%s1] sm:$0xff]
    %v85 = vld [vmem:[%s1 + $0x8] sm:$0xff]
    %v88 = vcombine.low %v84, %v84
    %v90 = vunpack.c.l.s4 1983009808
    %v91 = vunpack.c.0.s8 %v90
    %v92 = vlaneseq
    %v93 = vshrl.u32 %v92, 7
    %v94 = vsub.s32 %v91, %v93
    %v95 = vrot.slane %v88, %v94
    %v97 = vunpack.c.l.s4 1983009808
    %v98 = vunpack.c.0.s8 %v97
    %v99 = vlaneseq
    %v100 = vshrl.u32 %v99, 7
    %v101 = vsub.s32 %v98, %v100
    %v102 = vrot.slane %v84, %v101
    %v103 = vcombine.low %v85, %v85
    %v105 = vunpack.c.l.s4 1983009808
    %v106 = vunpack.c.0.s8 %v105
    %v107 = vlaneseq
    %v108 = vshrl.u32 %v107, 7
    %v109 = vsub.s32 %v106, %v108
    %v110 = vrot.slane %v103, %v109
    %v112 = vunpack.c.l.s4 1983009808
    %v113 = vunpack.c.0.s8 %v112
    %v114 = vlaneseq
    %v115 = vshrl.u32 %v114, 7
    %v116 = vsub.s32 %v113, %v115
    %v117 = vrot.slane %v85, %v116
    %122 = vst [vmem:[#allocation2] sm:$0xcc] %v95
    %123 = vst [vmem:[#allocation2 + $0x8] sm:$0xcc] %v102
    %124 = vst [vmem:[#allocation2 + $0x10] sm:$0xcc] %v110
    %125 = vst [vmem:[#allocation2 + $0x18] sm:$0xcc] %v117
    %v126 = vld [vmem:[#allocation2] sm:$0xff]
    %v127 = vld [vmem:[#allocation2 + $0x8] sm:$0xff]
    %v128 = vld [vmem:[#allocation2 + $0x10] sm:$0xff]
    %v129 = vld [vmem:[#allocation2 + $0x18] sm:$0xff]
    %v134 = vcombine.high %v126, %v126
    %v135 = vcombine.high %v127, %v127
    %v136 = vcombine.high %v128, %v128
    %v137 = vcombine.high %v129, %v129
    %v142 = vpack.c.bf16 %v126, %v126
    %v143 = vpack.c.bf16 %v134, %v134
    %v144 = vpack.c.bf16 %v127, %v127
    %v145 = vpack.c.bf16 %v135, %v135
    %v146 = vpack.c.bf16 %v128, %v128
    %v147 = vpack.c.bf16 %v136, %v136
    %v148 = vpack.c.bf16 %v129, %v129
    %v149 = vpack.c.bf16 %v137, %v137
    %v150 = vld [vmem:[#allocation3] sm:$0xf]
    %v151 = vld [vmem:[#allocation3 + $0x4] sm:$0xf]
    %v152 = vld [vmem:[#allocation3 + $0x8] sm:$0xf]
    %v153 = vld [vmem:[#allocation3 + $0xc] sm:$0xf]
    %v154 = vld [vmem:[#allocation3 + $0x10] sm:$0xf]
    %v155 = vld [vmem:[#allocation3 + $0x14] sm:$0xf]
    %v156 = vld [vmem:[#allocation3 + $0x18] sm:$0xf]
    %v157 = vld [vmem:[#allocation3 + $0x1c] sm:$0xf]
    %v158 = vld [vmem:[#allocation3 + $0x20] sm:$0xf]
    %v159 = vld [vmem:[#allocation3 + $0x24] sm:$0xf]
    %v160 = vld [vmem:[#allocation3 + $0x28] sm:$0xf]
    %v161 = vld [vmem:[#allocation3 + $0x2c] sm:$0xf]
    %v162 = vld [vmem:[#allocation3 + $0x30] sm:$0xf]
    %v163 = vld [vmem:[#allocation3 + $0x34] sm:$0xf]
    %v164 = vld [vmem:[#allocation3 + $0x38] sm:$0xf]
    %v165 = vld [vmem:[#allocation3 + $0x3c] sm:$0xf]
    %v166 = vld [vmem:[#allocation3 + $0x40] sm:$0xf]
    %v167 = vld [vmem:[#allocation3 + $0x44] sm:$0xf]
    %v168 = vld [vmem:[#allocation3 + $0x48] sm:$0xf]
    %v169 = vld [vmem:[#allocation3 + $0x4c] sm:$0xf]
    %v170 = vld [vmem:[#allocation3 + $0x50] sm:$0xf]
    %v171 = vld [vmem:[#allocation3 + $0x54] sm:$0xf]
    %v172 = vld [vmem:[#allocation3 + $0x58] sm:$0xf]
    %v173 = vld [vmem:[#allocation3 + $0x5c] sm:$0xf]
    %v174 = vld [vmem:[#allocation3 + $0x60] sm:$0xf]
    %v175 = vld [vmem:[#allocation3 + $0x64] sm:$0xf]
    %v176 = vld [vmem:[#allocation3 + $0x68] sm:$0xf]
    %v177 = vld [vmem:[#allocation3 + $0x6c] sm:$0xf]
    %v178 = vld [vmem:[#allocation3 + $0x70] sm:$0xf]
    %v179 = vld [vmem:[#allocation3 + $0x74] sm:$0xf]
    %v180 = vld [vmem:[#allocation3 + $0x78] sm:$0xf]
    %v181 = vld [vmem:[#allocation3 + $0x7c] sm:$0xf]
    %v182 = vld [vmem:[#allocation3 + $0x80] sm:$0xf]
    %v183 = vld [vmem:[#allocation3 + $0x84] sm:$0xf]
    %v184 = vld [vmem:[#allocation3 + $0x88] sm:$0xf]
    %v185 = vld [vmem:[#allocation3 + $0x8c] sm:$0xf]
    %v186 = vld [vmem:[#allocation3 + $0x90] sm:$0xf]
    %v187 = vld [vmem:[#allocation3 + $0x94] sm:$0xf]
    %v188 = vld [vmem:[#allocation3 + $0x98] sm:$0xf]
    %v189 = vld [vmem:[#allocation3 + $0x9c] sm:$0xf]
    %v190 = vld [vmem:[#allocation3 + $0xa0] sm:$0xf]
    %v191 = vld [vmem:[#allocation3 + $0xa4] sm:$0xf]
    %v192 = vld [vmem:[#allocation3 + $0xa8] sm:$0xf]
    %v193 = vld [vmem:[#allocation3 + $0xac] sm:$0xf]
    %v194 = vld [vmem:[#allocation3 + $0xb0] sm:$0xf]
    %v195 = vld [vmem:[#allocation3 + $0xb4] sm:$0xf]
    %v196 = vld [vmem:[#allocation3 + $0xb8] sm:$0xf]
    %v197 = vld [vmem:[#allocation3 + $0xbc] sm:$0xf]
    %v198 = vld [vmem:[#allocation3 + $0xc0] sm:$0xf]
    %v199 = vld [vmem:[#allocation3 + $0xc4] sm:$0xf]
    %v200 = vld [vmem:[#allocation3 + $0xc8] sm:$0xf]
    %v201 = vld [vmem:[#allocation3 + $0xcc] sm:$0xf]
    %v202 = vld [vmem:[#allocation3 + $0xd0] sm:$0xf]
    %v203 = vld [vmem:[#allocation3 + $0xd4] sm:$0xf]
    %v204 = vld [vmem:[#allocation3 + $0xd8] sm:$0xf]
    %v205 = vld [vmem:[#allocation3 + $0xdc] sm:$0xf]
    %v206 = vld [vmem:[#allocation3 + $0xe0] sm:$0xf]
    %v207 = vld [vmem:[#allocation3 + $0xe4] sm:$0xf]
    %v208 = vld [vmem:[#allocation3 + $0xe8] sm:$0xf]
    %v209 = vld [vmem:[#allocation3 + $0xec] sm:$0xf]
    %v210 = vld [vmem:[#allocation3 + $0xf0] sm:$0xf]
    %v211 = vld [vmem:[#allocation3 + $0xf4] sm:$0xf]
    %v212 = vld [vmem:[#allocation3 + $0xf8] sm:$0xf]
    %v213 = vld [vmem:[#allocation3 + $0xfc] sm:$0xf]
    %v214 = vld [vmem:[#allocation3 + $0x100] sm:$0xf]
    %v215 = vld [vmem:[#allocation3 + $0x104] sm:$0xf]
    %v216 = vld [vmem:[#allocation3 + $0x108] sm:$0xf]
    %v217 = vld [vmem:[#allocation3 + $0x10c] sm:$0xf]
    %v218 = vld [vmem:[#allocation3 + $0x110] sm:$0xf]
    %v219 = vld [vmem:[#allocation3 + $0x114] sm:$0xf]
    %v220 = vld [vmem:[#allocation3 + $0x118] sm:$0xf]
    %v221 = vld [vmem:[#allocation3 + $0x11c] sm:$0xf]
    %v222 = vld [vmem:[#allocation3 + $0x120] sm:$0xf]
    %v223 = vld [vmem:[#allocation3 + $0x124] sm:$0xf]
    %v224 = vld [vmem:[#allocation3 + $0x128] sm:$0xf]
    %v225 = vld [vmem:[#allocation3 + $0x12c] sm:$0xf]
    %v226 = vld [vmem:[#allocation3 + $0x130] sm:$0xf]
    %v227 = vld [vmem:[#allocation3 + $0x134] sm:$0xf]
    %v228 = vld [vmem:[#allocation3 + $0x138] sm:$0xf]
    %v229 = vld [vmem:[#allocation3 + $0x13c] sm:$0xf]
    %v230 = vld [vmem:[#allocation3 + $0x140] sm:$0xf]
    %v231 = vld [vmem:[#allocation3 + $0x144] sm:$0xf]
    %v232 = vld [vmem:[#allocation3 + $0x148] sm:$0xf]
    %v233 = vld [vmem:[#allocation3 + $0x14c] sm:$0xf]
    %v234 = vld [vmem:[#allocation3 + $0x150] sm:$0xf]
    %v235 = vld [vmem:[#allocation3 + $0x154] sm:$0xf]
    %v236 = vld [vmem:[#allocation3 + $0x158] sm:$0xf]
    %v237 = vld [vmem:[#allocation3 + $0x15c] sm:$0xf]
    %v238 = vld [vmem:[#allocation3 + $0x160] sm:$0xf]
    %v239 = vld [vmem:[#allocation3 + $0x164] sm:$0xf]
    %v240 = vld [vmem:[#allocation3 + $0x168] sm:$0xf]
    %v241 = vld [vmem:[#allocation3 + $0x16c] sm:$0xf]
    %v242 = vld [vmem:[#allocation3 + $0x170] sm:$0xf]
    %v243 = vld [vmem:[#allocation3 + $0x174] sm:$0xf]
    %v244 = vld [vmem:[#allocation3 + $0x178] sm:$0xf]
    %v245 = vld [vmem:[#allocation3 + $0x17c] sm:$0xf]
    %v246 = vld [vmem:[#allocation3 + $0x180] sm:$0xf]
    %v247 = vld [vmem:[#allocation3 + $0x184] sm:$0xf]
    %v248 = vld [vmem:[#allocation3 + $0x188] sm:$0xf]
    %v249 = vld [vmem:[#allocation3 + $0x18c] sm:$0xf]
    %v250 = vld [vmem:[#allocation3 + $0x190] sm:$0xf]
    %v251 = vld [vmem:[#allocation3 + $0x194] sm:$0xf]
    %v252 = vld [vmem:[#allocation3 + $0x198] sm:$0xf]
    %v253 = vld [vmem:[#allocation3 + $0x19c] sm:$0xf]
    %v254 = vld [vmem:[#allocation3 + $0x1a0] sm:$0xf]
    %v255 = vld [vmem:[#allocation3 + $0x1a4] sm:$0xf]
    %v256 = vld [vmem:[#allocation3 + $0x1a8] sm:$0xf]
    %v257 = vld [vmem:[#allocation3 + $0x1ac] sm:$0xf]
    %v258 = vld [vmem:[#allocation3 + $0x1b0] sm:$0xf]
    %v259 = vld [vmem:[#allocation3 + $0x1b4] sm:$0xf]
    %v260 = vld [vmem:[#allocation3 + $0x1b8] sm:$0xf]
    %v261 = vld [vmem:[#allocation3 + $0x1bc] sm:$0xf]
    %v262 = vld [vmem:[#allocation3 + $0x1c0] sm:$0xf]
    %v263 = vld [vmem:[#allocation3 + $0x1c4] sm:$0xf]
    %v264 = vld [vmem:[#allocation3 + $0x1c8] sm:$0xf]
    %v265 = vld [vmem:[#allocation3 + $0x1cc] sm:$0xf]
    %v266 = vld [vmem:[#allocation3 + $0x1d0] sm:$0xf]
    %v267 = vld [vmem:[#allocation3 + $0x1d4] sm:$0xf]
    %v268 = vld [vmem:[#allocation3 + $0x1d8] sm:$0xf]
    %v269 = vld [vmem:[#allocation3 + $0x1dc] sm:$0xf]
    %v270 = vld [vmem:[#allocation3 + $0x1e0] sm:$0xf]
    %v271 = vld [vmem:[#allocation3 + $0x1e4] sm:$0xf]
    %v272 = vld [vmem:[#allocation3 + $0x1e8] sm:$0xf]
    %v273 = vld [vmem:[#allocation3 + $0x1ec] sm:$0xf]
    %v274 = vld [vmem:[#allocation3 + $0x1f0] sm:$0xf]
    %v275 = vld [vmem:[#allocation3 + $0x1f4] sm:$0xf]
    %v276 = vld [vmem:[#allocation3 + $0x1f8] sm:$0xf]
    %v277 = vld [vmem:[#allocation3 + $0x1fc] sm:$0xf]
    %v278 = vld [vmem:[%s3] sm:$0x1]
    %v280 = vlaneseq
    %v281 = vshrl.u32 %v280, 7
    %v282 = vsub.s32 0, %v281
    %v283 = vrot.slane %v278, %v282
    %v413 = vunpack.c.l.b16 %v150
    %v414 = vunpack.c.l.b16 %v151
    %v415 = vunpack.c.l.b16 %v152
    %v416 = vunpack.c.l.b16 %v153
    %v417 = vunpack.c.l.b16 %v154
    %v418 = vunpack.c.l.b16 %v155
    %v419 = vunpack.c.l.b16 %v156
    %v420 = vunpack.c.l.b16 %v157
    %v421 = vunpack.c.l.b16 %v158
    %v422 = vunpack.c.l.b16 %v159
    %v423 = vunpack.c.l.b16 %v160
    %v424 = vunpack.c.l.b16 %v161
    %v425 = vunpack.c.l.b16 %v162
    %v426 = vunpack.c.l.b16 %v163
    %v427 = vunpack.c.l.b16 %v164
    %v428 = vunpack.c.l.b16 %v165
    %v429 = vunpack.c.l.b16 %v166
    %v430 = vunpack.c.l.b16 %v167
    %v431 = vunpack.c.l.b16 %v168
    %v432 = vunpack.c.l.b16 %v169
    %v433 = vunpack.c.l.b16 %v170
    %v434 = vunpack.c.l.b16 %v171
    %v435 = vunpack.c.l.b16 %v172
    %v436 = vunpack.c.l.b16 %v173
    %v437 = vunpack.c.l.b16 %v174
    %v438 = vunpack.c.l.b16 %v175
    %v439 = vunpack.c.l.b16 %v176
    %v440 = vunpack.c.l.b16 %v177
    %v441 = vunpack.c.l.b16 %v178
    %v442 = vunpack.c.l.b16 %v179
    %v443 = vunpack.c.l.b16 %v180
    %v444 = vunpack.c.l.b16 %v181
    %v445 = vunpack.c.l.b16 %v182
    %v446 = vunpack.c.l.b16 %v183
    %v447 = vunpack.c.l.b16 %v184
    %v448 = vunpack.c.l.b16 %v185
    %v449 = vunpack.c.l.b16 %v186
    %v450 = vunpack.c.l.b16 %v187
    %v451 = vunpack.c.l.b16 %v188
    %v452 = vunpack.c.l.b16 %v189
    %v453 = vunpack.c.l.b16 %v190
    %v454 = vunpack.c.l.b16 %v191
    %v455 = vunpack.c.l.b16 %v192
    %v456 = vunpack.c.l.b16 %v193
    %v457 = vunpack.c.l.b16 %v194
    %v458 = vunpack.c.l.b16 %v195
    %v459 = vunpack.c.l.b16 %v196
    %v460 = vunpack.c.l.b16 %v197
    %v461 = vunpack.c.l.b16 %v198
    %v462 = vunpack.c.l.b16 %v199
    %v463 = vunpack.c.l.b16 %v200
    %v464 = vunpack.c.l.b16 %v201
    %v465 = vunpack.c.l.b16 %v202
    %v466 = vunpack.c.l.b16 %v203
    %v467 = vunpack.c.l.b16 %v204
    %v468 = vunpack.c.l.b16 %v205
    %v469 = vunpack.c.l.b16 %v206
    %v470 = vunpack.c.l.b16 %v207
    %v471 = vunpack.c.l.b16 %v208
    %v472 = vunpack.c.l.b16 %v209
    %v473 = vunpack.c.l.b16 %v210
    %v474 = vunpack.c.l.b16 %v211
    %v475 = vunpack.c.l.b16 %v212
    %v476 = vunpack.c.l.b16 %v213
    %v477 = vunpack.c.l.b16 %v214
    %v478 = vunpack.c.l.b16 %v215
    %v479 = vunpack.c.l.b16 %v216
    %v480 = vunpack.c.l.b16 %v217
    %v481 = vunpack.c.l.b16 %v218
    %v482 = vunpack.c.l.b16 %v219
    %v483 = vunpack.c.l.b16 %v220
    %v484 = vunpack.c.l.b16 %v221
    %v485 = vunpack.c.l.b16 %v222
    %v486 = vunpack.c.l.b16 %v223
    %v487 = vunpack.c.l.b16 %v224
    %v488 = vunpack.c.l.b16 %v225
    %v489 = vunpack.c.l.b16 %v226
    %v490 = vunpack.c.l.b16 %v227
    %v491 = vunpack.c.l.b16 %v228
    %v492 = vunpack.c.l.b16 %v229
    %v493 = vunpack.c.l.b16 %v230
    %v494 = vunpack.c.l.b16 %v231
    %v495 = vunpack.c.l.b16 %v232
    %v496 = vunpack.c.l.b16 %v233
    %v497 = vunpack.c.l.b16 %v234
    %v498 = vunpack.c.l.b16 %v235
    %v499 = vunpack.c.l.b16 %v236
    %v500 = vunpack.c.l.b16 %v237
    %v501 = vunpack.c.l.b16 %v238
    %v502 = vunpack.c.l.b16 %v239
    %v503 = vunpack.c.l.b16 %v240
    %v504 = vunpack.c.l.b16 %v241
    %v505 = vunpack.c.l.b16 %v242
    %v506 = vunpack.c.l.b16 %v243
    %v507 = vunpack.c.l.b16 %v244
    %v508 = vunpack.c.l.b16 %v245
    %v509 = vunpack.c.l.b16 %v246
    %v510 = vunpack.c.l.b16 %v247
    %v511 = vunpack.c.l.b16 %v248
    %v512 = vunpack.c.l.b16 %v249
    %v513 = vunpack.c.l.b16 %v250
    %v514 = vunpack.c.l.b16 %v251
    %v515 = vunpack.c.l.b16 %v252
    %v516 = vunpack.c.l.b16 %v253
    %v517 = vunpack.c.l.b16 %v254
    %v518 = vunpack.c.l.b16 %v255
    %v519 = vunpack.c.l.b16 %v256
    %v520 = vunpack.c.l.b16 %v257
    %v521 = vunpack.c.l.b16 %v258
    %v522 = vunpack.c.l.b16 %v259
    %v523 = vunpack.c.l.b16 %v260
    %v524 = vunpack.c.l.b16 %v261
    %v525 = vunpack.c.l.b16 %v262
    %v526 = vunpack.c.l.b16 %v263
    %v527 = vunpack.c.l.b16 %v264
    %v528 = vunpack.c.l.b16 %v265
    %v529 = vunpack.c.l.b16 %v266
    %v530 = vunpack.c.l.b16 %v267
    %v531 = vunpack.c.l.b16 %v268
    %v532 = vunpack.c.l.b16 %v269
    %v533 = vunpack.c.l.b16 %v270
    %v534 = vunpack.c.l.b16 %v271
    %v535 = vunpack.c.l.b16 %v272
    %v536 = vunpack.c.l.b16 %v273
    %v537 = vunpack.c.l.b16 %v274
    %v538 = vunpack.c.l.b16 %v275
    %v539 = vunpack.c.l.b16 %v276
    %v540 = vunpack.c.l.b16 %v277
    %v541 = vpack.c.b16 %v414, %v413
    %v542 = vpack.c.b16 %v416, %v415
    %v543 = vpack.c.b16 %v418, %v417
    %v544 = vpack.c.b16 %v420, %v419
    %v545 = vpack.c.b16 %v422, %v421
    %v546 = vpack.c.b16 %v424, %v423
    %v547 = vpack.c.b16 %v426, %v425
    %v548 = vpack.c.b16 %v428, %v427
    %v549 = vpack.c.b16 %v430, %v429
    %v550 = vpack.c.b16 %v432, %v431
    %v551 = vpack.c.b16 %v434, %v433
    %v552 = vpack.c.b16 %v436, %v435
    %v553 = vpack.c.b16 %v438, %v437
    %v554 = vpack.c.b16 %v440, %v439
    %v555 = vpack.c.b16 %v442, %v441
    %v556 = vpack.c.b16 %v444, %v443
    %v557 = vpack.c.b16 %v446, %v445
    %v558 = vpack.c.b16 %v448, %v447
    %v559 = vpack.c.b16 %v450, %v449
    %v560 = vpack.c.b16 %v452, %v451
    %v561 = vpack.c.b16 %v454, %v453
    %v562 = vpack.c.b16 %v456, %v455
    %v563 = vpack.c.b16 %v458, %v457
    %v564 = vpack.c.b16 %v460, %v459
    %v565 = vpack.c.b16 %v462, %v461
    %v566 = vpack.c.b16 %v464, %v463
    %v567 = vpack.c.b16 %v466, %v465
    %v568 = vpack.c.b16 %v468, %v467
    %v569 = vpack.c.b16 %v470, %v469
    %v570 = vpack.c.b16 %v472, %v471
    %v571 = vpack.c.b16 %v474, %v473
    %v572 = vpack.c.b16 %v476, %v475
    %v573 = vpack.c.b16 %v478, %v477
    %v574 = vpack.c.b16 %v480, %v479
    %v575 = vpack.c.b16 %v482, %v481
    %v576 = vpack.c.b16 %v484, %v483
    %v577 = vpack.c.b16 %v486, %v485
    %v578 = vpack.c.b16 %v488, %v487
    %v579 = vpack.c.b16 %v490, %v489
    %v580 = vpack.c.b16 %v492, %v491
    %v581 = vpack.c.b16 %v494, %v493
    %v582 = vpack.c.b16 %v496, %v495
    %v583 = vpack.c.b16 %v498, %v497
    %v584 = vpack.c.b16 %v500, %v499
    %v585 = vpack.c.b16 %v502, %v501
    %v586 = vpack.c.b16 %v504, %v503
    %v587 = vpack.c.b16 %v506, %v505
    %v588 = vpack.c.b16 %v508, %v507
    %v589 = vpack.c.b16 %v510, %v509
    %v590 = vpack.c.b16 %v512, %v511
    %v591 = vpack.c.b16 %v514, %v513
    %v592 = vpack.c.b16 %v516, %v515
    %v593 = vpack.c.b16 %v518, %v517
    %v594 = vpack.c.b16 %v520, %v519
    %v595 = vpack.c.b16 %v522, %v521
    %v596 = vpack.c.b16 %v524, %v523
    %v597 = vpack.c.b16 %v526, %v525
    %v598 = vpack.c.b16 %v528, %v527
    %v599 = vpack.c.b16 %v530, %v529
    %v600 = vpack.c.b16 %v532, %v531
    %v601 = vpack.c.b16 %v534, %v533
    %v602 = vpack.c.b16 %v536, %v535
    %v603 = vpack.c.b16 %v538, %v537
    %v604 = vpack.c.b16 %v540, %v539
    %669 = vmatprep.subr.bf16.mxu0 0
    %670 = vmatpush1.bf16.msra.mxu0 %v548
    %671 = vmatprep.subr.bf16.mxu0 0
    %672 = vmatpush1.bf16.msra.mxu0 %v547
    %673 = vmatprep.subr.bf16.mxu0 0
    %674 = vmatpush1.bf16.msra.mxu0 %v546
    %675 = vmatprep.subr.bf16.mxu0 0
    %676 = vmatpush1.bf16.msra.mxu0 %v545
    %677 = vmatprep.subr.bf16.mxu0 0
    %678 = vmatpush1.bf16.msra.mxu0 %v544
    %679 = vmatprep.subr.bf16.mxu0 0
    %680 = vmatpush1.bf16.msra.mxu0 %v543
    %681 = vmatprep.subr.bf16.mxu0 0
    %682 = vmatpush1.bf16.msra.mxu0 %v542
    %683 = vmatprep.subr.bf16.mxu0 0
    %684 = vmatpush1.bf16.msra.mxu0 %v541
    %685 = vmatprep.subr.bf16.mxu0 0
    %686 = vmatpush2.bf16.msra.mxu0 %v556
    %687 = vmatprep.subr.bf16.mxu0 0
    %688 = vmatpush2.bf16.msra.mxu0 %v555
    %689 = vmatprep.subr.bf16.mxu0 0
    %690 = vmatpush2.bf16.msra.mxu0 %v554
    %691 = vmatprep.subr.bf16.mxu0 0
    %692 = vmatpush2.bf16.msra.mxu0 %v553
    %693 = vmatprep.subr.bf16.mxu0 0
    %694 = vmatpush2.bf16.msra.mxu0 %v552
    %695 = vmatprep.subr.bf16.mxu0 0
    %696 = vmatpush2.bf16.msra.mxu0 %v551
    %697 = vmatprep.subr.bf16.mxu0 0
    %698 = vmatpush2.bf16.msra.mxu0 %v550
    %699 = vmatprep.subr.bf16.mxu0 0
    %700 = vmatpush2.bf16.msra.mxu0 %v549
    %701 = vmatprep.mubr.bf16.mxu0 %v143
    %702 = vmatmul.mubr.bf16.gmra.mxu0 %v142
    %v703 = vpop.f32.mrf.mxu0
    %v704 = vadd.f32 %v283, %v703
    %v705 = vpop.f32.mrf.mxu0
    %v706 = vpop.f32.mrf.mxu0
    %v707 = vpop.f32.mrf.mxu0
    %708 = vdwg.mxu0
    %709 = vmatprep.subr.bf16.mxu0 0
    %710 = vmatpush1.bf16.msra.mxu0 %v564
    %711 = vmatprep.subr.bf16.mxu0 0
    %712 = vmatpush1.bf16.msra.mxu0 %v563
    %713 = vmatprep.subr.bf16.mxu0 0
    %714 = vmatpush1.bf16.msra.mxu0 %v562
    %715 = vmatprep.subr.bf16.mxu0 0
    %716 = vmatpush1.bf16.msra.mxu0 %v561
    %717 = vmatprep.subr.bf16.mxu0 0
    %718 = vmatpush1.bf16.msra.mxu0 %v560
    %719 = vmatprep.subr.bf16.mxu0 0
    %720 = vmatpush1.bf16.msra.mxu0 %v559
    %721 = vmatprep.subr.bf16.mxu0 0
    %722 = vmatpush1.bf16.msra.mxu0 %v558
    %723 = vmatprep.subr.bf16.mxu0 0
    %724 = vmatpush1.bf16.msra.mxu0 %v557
    %725 = vmatprep.subr.bf16.mxu0 0
    %726 = vmatpush2.bf16.msra.mxu0 %v572
    %727 = vmatprep.subr.bf16.mxu0 0
    %728 = vmatpush2.bf16.msra.mxu0 %v571
    %729 = vmatprep.subr.bf16.mxu0 0
    %730 = vmatpush2.bf16.msra.mxu0 %v570
    %731 = vmatprep.subr.bf16.mxu0 0
    %732 = vmatpush2.bf16.msra.mxu0 %v569
    %733 = vmatprep.subr.bf16.mxu0 0
    %734 = vmatpush2.bf16.msra.mxu0 %v568
    %735 = vmatprep.subr.bf16.mxu0 0
    %736 = vmatpush2.bf16.msra.mxu0 %v567
    %737 = vmatprep.subr.bf16.mxu0 0
    %738 = vmatpush2.bf16.msra.mxu0 %v566
    %739 = vmatprep.subr.bf16.mxu0 0
    %740 = vmatpush2.bf16.msra.mxu0 %v565
    %741 = vmatprep.mubr.bf16.mxu0 %v145
    %742 = vmatmul.mubr.bf16.gmra.mxu0 %v144
    %v743 = vpop.f32.mrf.mxu0
    %v744 = vadd.f32 %v704, %v743
    %v745 = vpop.f32.mrf.mxu0
    %v746 = vpop.f32.mrf.mxu0
    %v747 = vpop.f32.mrf.mxu0
    %748 = vdwg.mxu0
    %749 = vmatprep.subr.bf16.mxu0 0
    %750 = vmatpush1.bf16.msra.mxu0 %v580
    %751 = vmatprep.subr.bf16.mxu0 0
    %752 = vmatpush1.bf16.msra.mxu0 %v579
    %753 = vmatprep.subr.bf16.mxu0 0
    %754 = vmatpush1.bf16.msra.mxu0 %v578
    %755 = vmatprep.subr.bf16.mxu0 0
    %756 = vmatpush1.bf16.msra.mxu0 %v577
    %757 = vmatprep.subr.bf16.mxu0 0
    %758 = vmatpush1.bf16.msra.mxu0 %v576
    %759 = vmatprep.subr.bf16.mxu0 0
    %760 = vmatpush1.bf16.msra.mxu0 %v575
    %761 = vmatprep.subr.bf16.mxu0 0
    %762 = vmatpush1.bf16.msra.mxu0 %v574
    %763 = vmatprep.subr.bf16.mxu0 0
    %764 = vmatpush1.bf16.msra.mxu0 %v573
    %765 = vmatprep.subr.bf16.mxu0 0
    %766 = vmatpush2.bf16.msra.mxu0 %v588
    %767 = vmatprep.subr.bf16.mxu0 0
    %768 = vmatpush2.bf16.msra.mxu0 %v587
    %769 = vmatprep.subr.bf16.mxu0 0
    %770 = vmatpush2.bf16.msra.mxu0 %v586
    %771 = vmatprep.subr.bf16.mxu0 0
    %772 = vmatpush2.bf16.msra.mxu0 %v585
    %773 = vmatprep.subr.bf16.mxu0 0
    %774 = vmatpush2.bf16.msra.mxu0 %v584
    %775 = vmatprep.subr.bf16.mxu0 0
    %776 = vmatpush2.bf16.msra.mxu0 %v583
    %777 = vmatprep.subr.bf16.mxu0 0
    %778 = vmatpush2.bf16.msra.mxu0 %v582
    %779 = vmatprep.subr.bf16.mxu0 0
    %780 = vmatpush2.bf16.msra.mxu0 %v581
    %781 = vmatprep.mubr.bf16.mxu0 %v147
    %782 = vmatmul.mubr.bf16.gmra.mxu0 %v146
    %v783 = vpop.f32.mrf.mxu0
    %v784 = vadd.f32 %v744, %v783
    %v785 = vpop.f32.mrf.mxu0
    %v786 = vpop.f32.mrf.mxu0
    %v787 = vpop.f32.mrf.mxu0
    %788 = vdwg.mxu0
    %789 = vmatprep.subr.bf16.mxu0 0
    %790 = vmatpush1.bf16.msra.mxu0 %v596
    %791 = vmatprep.subr.bf16.mxu0 0
    %792 = vmatpush1.bf16.msra.mxu0 %v595
    %793 = vmatprep.subr.bf16.mxu0 0
    %794 = vmatpush1.bf16.msra.mxu0 %v594
    %795 = vmatprep.subr.bf16.mxu0 0
    %796 = vmatpush1.bf16.msra.mxu0 %v593
    %797 = vmatprep.subr.bf16.mxu0 0
    %798 = vmatpush1.bf16.msra.mxu0 %v592
    %799 = vmatprep.subr.bf16.mxu0 0
    %800 = vmatpush1.bf16.msra.mxu0 %v591
    %801 = vmatprep.subr.bf16.mxu0 0
    %802 = vmatpush1.bf16.msra.mxu0 %v590
    %803 = vmatprep.subr.bf16.mxu0 0
    %804 = vmatpush1.bf16.msra.mxu0 %v589
    %805 = vmatprep.subr.bf16.mxu0 0
    %806 = vmatpush2.bf16.msra.mxu0 %v604
    %807 = vmatprep.subr.bf16.mxu0 0
    %808 = vmatpush2.bf16.msra.mxu0 %v603
    %809 = vmatprep.subr.bf16.mxu0 0
    %810 = vmatpush2.bf16.msra.mxu0 %v602
    %811 = vmatprep.subr.bf16.mxu0 0
    %812 = vmatpush2.bf16.msra.mxu0 %v601
    %813 = vmatprep.subr.bf16.mxu0 0
    %814 = vmatpush2.bf16.msra.mxu0 %v600
    %815 = vmatprep.subr.bf16.mxu0 0
    %816 = vmatpush2.bf16.msra.mxu0 %v599
    %817 = vmatprep.subr.bf16.mxu0 0
    %818 = vmatpush2.bf16.msra.mxu0 %v598
    %819 = vmatprep.subr.bf16.mxu0 0
    %820 = vmatpush2.bf16.msra.mxu0 %v597
    %821 = vmatprep.mubr.bf16.mxu0 %v149
    %822 = vmatmul.mubr.bf16.gmra.mxu0 %v148
    %v823 = vpop.f32.mrf.mxu0
    %v824 = vadd.f32 %v784, %v823
    %v825 = vpop.f32.mrf.mxu0
    %v826 = vpop.f32.mrf.mxu0
    %v827 = vpop.f32.mrf.mxu0
    %828 = vdwg.mxu0
    %v829 = vmax.f32 %v824, 0.0
    %v830 = vld [vmem:[%s4] sm:$0xff]
    %v831 = vld [vmem:[%s4 + $0x8] sm:$0xff]
    %v832 = vld [vmem:[%s4 + $0x10] sm:$0xff]
    %v833 = vld [vmem:[%s4 + $0x18] sm:$0xff]
    %v834 = vld [vmem:[%s4 + $0x20] sm:$0xff]
    %v835 = vld [vmem:[%s4 + $0x28] sm:$0xff]
    %v836 = vld [vmem:[%s4 + $0x30] sm:$0xff]
    %v837 = vld [vmem:[%s4 + $0x38] sm:$0xff]
    %v838 = vld [vmem:[%s4 + $0x40] sm:$0xff]
    %v839 = vld [vmem:[%s4 + $0x48] sm:$0xff]
    %v840 = vld [vmem:[%s4 + $0x50] sm:$0xff]
    %v841 = vld [vmem:[%s4 + $0x58] sm:$0xff]
    %v842 = vld [vmem:[%s4 + $0x60] sm:$0xff]
    %v843 = vld [vmem:[%s4 + $0x68] sm:$0xff]
    %v844 = vld [vmem:[%s4 + $0x70] sm:$0xff]
    %v845 = vld [vmem:[%s4 + $0x78] sm:$0xff]
    %v846 = vld [vmem:[%s5] sm:$0x1]
    %v848 = vlaneseq
    %v849 = vshrl.u32 %v848, 7
    %v850 = vsub.s32 0, %v849
    %v851 = vrot.slane %v846, %v850
    %853 = vmatprep.subr.mxu0 0.0
    %854 = vmatpush1.msra.mxu0 %v845
    %855 = vmatprep.subr.mxu0 0.0
    %856 = vmatpush1.msra.mxu0 %v844
    %857 = vmatprep.subr.mxu0 0.0
    %858 = vmatpush1.msra.mxu0 %v843
    %859 = vmatprep.subr.mxu0 0.0
    %860 = vmatpush1.msra.mxu0 %v842
    %861 = vmatprep.subr.mxu0 0.0
    %862 = vmatpush1.msra.mxu0 %v841
    %863 = vmatprep.subr.mxu0 0.0
    %864 = vmatpush1.msra.mxu0 %v840
    %865 = vmatprep.subr.mxu0 0.0
    %866 = vmatpush1.msra.mxu0 %v839
    %867 = vmatprep.subr.mxu0 0.0
    %868 = vmatpush1.msra.mxu0 %v838
    %869 = vmatprep.subr.mxu0 0.0
    %870 = vmatpush1.msra.mxu0 %v837
    %871 = vmatprep.subr.mxu0 0.0
    %872 = vmatpush1.msra.mxu0 %v836
    %873 = vmatprep.subr.mxu0 0.0
    %874 = vmatpush1.msra.mxu0 %v835
    %875 = vmatprep.subr.mxu0 0.0
    %876 = vmatpush1.msra.mxu0 %v834
    %877 = vmatprep.subr.mxu0 0.0
    %878 = vmatpush1.msra.mxu0 %v833
    %879 = vmatprep.subr.mxu0 0.0
    %880 = vmatpush1.msra.mxu0 %v832
    %881 = vmatprep.subr.mxu0 0.0
    %882 = vmatpush1.msra.mxu0 %v831
    %883 = vmatprep.subr.mxu0 0.0
    %884 = vmatpush1.msra.mxu0 %v830
    %885 = vmatprep.subr.mxu0 0.0
    %886 = vmatpush2.msra.mxu0 0.0
    %887 = vmatprep.subr.mxu0 0.0
    %888 = vmatpush2.msra.mxu0 0.0
    %889 = vmatprep.subr.mxu0 0.0
    %890 = vmatpush2.msra.mxu0 0.0
    %891 = vmatprep.subr.mxu0 0.0
    %892 = vmatpush2.msra.mxu0 0.0
    %893 = vmatprep.subr.mxu0 0.0
    %894 = vmatpush2.msra.mxu0 0.0
    %895 = vmatprep.subr.mxu0 0.0
    %896 = vmatpush2.msra.mxu0 0.0
    %897 = vmatprep.subr.mxu0 0.0
    %898 = vmatpush2.msra.mxu0 0.0
    %899 = vmatprep.subr.mxu0 0.0
    %900 = vmatpush2.msra.mxu0 0.0
    %901 = vmatprep.subr.mxu0 0.0
    %902 = vmatpush2.msra.mxu0 0.0
    %903 = vmatprep.subr.mxu0 0.0
    %904 = vmatpush2.msra.mxu0 0.0
    %905 = vmatprep.subr.mxu0 0.0
    %906 = vmatpush2.msra.mxu0 0.0
    %907 = vmatprep.subr.mxu0 0.0
    %908 = vmatpush2.msra.mxu0 0.0
    %909 = vmatprep.subr.mxu0 0.0
    %910 = vmatpush2.msra.mxu0 0.0
    %911 = vmatprep.subr.mxu0 0.0
    %912 = vmatpush2.msra.mxu0 0.0
    %913 = vmatprep.subr.mxu0 0.0
    %914 = vmatpush2.msra.mxu0 0.0
    %915 = vmatprep.subr.mxu0 0.0
    %916 = vmatpush2.msra.mxu0 0.0
    %917 = vmatprep.mubr.f32.mxu0 0.0
    %918 = vmatmul.mubr.f32.gmra.mxu0 %v829
    %v919 = vpop.f32.mrf.mxu0
    %v920 = vadd.f32 %v851, %v919
    %v921 = vpop.f32.mrf.mxu0
    %922 = vdwg.mxu0
    %vm923 = vcmask 254976
    %924 = vst.msk [vmem:[#allocation6] sm:$0x3] %vm923, %v920
    %vm925 = vcmask 257026
    %926 = vst.msk [vmem:[#allocation7 - $0x2] sm:$0xc] %vm925, %v920
    // Predicated region
    $region30: #{siamese_forward.1} parent=1 // pred_check
      _
    $region31: #{siamese_forward.1} parent=1 // pred_check_branch
      %928 = sbr.rel (0) target = $region33
    $region32: #{siamese_forward.1} parent=1 // pred_region
      %s930 = ssub.s32 32, 32
      %931 = vsyncadd [#allocation5], %s930
      %s933 = sshll.u32 [#allocation6], 4
      %s934 = int_to_ptr.vmem [resolvable:$true] %s933
      %936 = dma.vmem_to_hbm [thread:$0]  %s934, 32, %s6, [#allocation5]
    $region33: #{siamese_forward.1} parent=1 // pred_fallthru
      _
    // Predicated region
    $region34: #{siamese_forward.1} parent=1 // pred_check
      _
    $region35: #{siamese_forward.1} parent=1 // pred_check_branch
      %938 = sbr.rel (0) target = $region37
    $region36: #{siamese_forward.1} parent=1 // pred_region
      %s940 = ssub.s32 32, 32
      %941 = vsyncadd [#allocation8], %s940
      %s943 = sshll.u32 [#allocation7], 4
      %s944 = int_to_ptr.vmem [resolvable:$true] %s943
      %946 = dma.vmem_to_hbm [thread:$0]  %s944, 32, %s7, [#allocation8]
    $region37: #{siamese_forward.1} parent=1 // pred_fallthru
      _
    // Predicated region
    $region38: #{siamese_forward.1} parent=1 // pred_check
      _
    $region39: #{siamese_forward.1} parent=1 // pred_check_branch
      %948 = sbr.rel (0) target = $region41
    $region40: #{siamese_forward.1} parent=1 // pred_region
      %949 = dma.done [#allocation5], 32
    $region41: #{siamese_forward.1} parent=1 // pred_fallthru
      _
    // Predicated region
    $region42: #{siamese_forward.1} parent=1 // pred_check
      _
    $region43: #{siamese_forward.1} parent=1 // pred_check_branch
      %951 = sbr.rel (0) target = $region45
    $region44: #{siamese_forward.1} parent=1 // pred_region
      %952 = dma.done [#allocation8], 32
    $region45: #{siamese_forward.1} parent=1 // pred_fallthru
      _
    %953 = vsyncpa [#allocation4], 1
    %954 = vsyncpa [#allocation5], 1
    %955 = vsyncpa [#allocation8], 1

</llo_original>
